<compile_context>
chip_gen: v6e
topology: v6e:2x2x1
jax: 0.10.0
libtpu: 0.0.40
codegen_flags: <defaults>
</compile_context>

<pallas_src>
import jax
import jax.numpy as jnp
from jax.experimental import pallas as pl
from jax.experimental.pallas import tpu as pltpu

NUM_CLASSES = 10
IN_FEATURES = 28 * 28          # 784
HIDDEN = 128
OUT_PAD = 128                  # lane-dense output width (>= NUM_CLASSES)
DEFAULT_TM = 1024              # max batch tile (rows per grid step)


def _round_up(x, m):
    return ((x + m - 1) // m) * m


def _choose_tm(batch, tm_max=DEFAULT_TM):
    """Pick the batch tile: big enough to amortize per-step overhead
    (v5e/v6e), but keep >=2 grid steps when possible so 'parallel' grid steps
    can be sharded across v7x's two TensorCores."""
    if batch >= 2 * tm_max:
        return tm_max
    if batch > 16:
        return _round_up((batch + 1) // 2, 8)
    return _round_up(max(batch, 1), 8)


def mlp_kernel(x_ref, w1_ref, b1_ref, w2_ref, b2_ref, o_ref):
    # cast x f32 -> bf16 on the VPU (hidden under the x DMA)
    x = x_ref[...].astype(jnp.bfloat16)
    # fc1: (TM, 784)bf16 @ (784, 128)bf16 -> f32, + bias
    h = jnp.dot(x, w1_ref[...], preferred_element_type=jnp.float32) + b1_ref[...]
    # fc2: (TM, 128)bf16 @ (128, 128)bf16 -> f32, + bias (padded to 128 lanes)
    y = jnp.dot(h.astype(jnp.bfloat16), w2_ref[...],
                preferred_element_type=jnp.float32) + b2_ref[...]
    o_ref[...] = y.astype(o_ref.dtype)


def prepare_params(w1, b1, w2, b2):
    """One-time param prep (hoisted out of the per-call path):
    bf16 weights stored as (in, out); fc2 weights/bias padded to 128 lanes."""
    w1p = jnp.asarray(w1, jnp.bfloat16).reshape(IN_FEATURES, HIDDEN)
    b1p = jnp.asarray(b1, jnp.float32).reshape(1, HIDDEN)
    w2p = jnp.zeros((HIDDEN, OUT_PAD), jnp.bfloat16)
    w2p = w2p.at[:, :NUM_CLASSES].set(jnp.asarray(w2, jnp.bfloat16))
    b2p = jnp.zeros((1, OUT_PAD), jnp.float32)
    b2p = b2p.at[:, :NUM_CLASSES].set(jnp.asarray(b2, jnp.float32).reshape(1, NUM_CLASSES))
    return w1p, b1p, w2p, b2p


def an_forward_prepared(x_nchw, w1p, b1p, w2p, b2p, *, tm=DEFAULT_TM):
    """x_nchw: (B, 1, 28, 28) float32 -> logits (B, NUM_CLASSES) float32."""
    B = x_nchw.shape[0]
    x = x_nchw.reshape(B, -1).astype(jnp.float32)   # nn.Flatten
    assert x.shape[1] == IN_FEATURES

    TM = _choose_tm(B, tm)
    grid = (pl.cdiv(B, TM),)

    cost = pl.CostEstimate(
        flops=2 * B * (IN_FEATURES * HIDDEN + HIDDEN * OUT_PAD),
        transcendentals=0,
        bytes_accessed=(x.size * 4 + w1p.size * 2 + w2p.size * 2
                        + b1p.size * 4 + b2p.size * 4 + B * OUT_PAD * 4),
    )

    out = pl.pallas_call(
        mlp_kernel,
        out_shape=jax.ShapeDtypeStruct((B, OUT_PAD), jnp.float32),
        grid_spec=pltpu.PrefetchScalarGridSpec(
            num_scalar_prefetch=0,
            grid=grid,
            in_specs=[
                pl.BlockSpec((TM, IN_FEATURES), lambda i: (i, 0)),   # x: pipelined
                pl.BlockSpec((IN_FEATURES, HIDDEN), lambda i: (0, 0)),  # w1: resident
                pl.BlockSpec((1, HIDDEN), lambda i: (0, 0)),            # b1: resident
                pl.BlockSpec((HIDDEN, OUT_PAD), lambda i: (0, 0)),      # w2: resident
                pl.BlockSpec((1, OUT_PAD), lambda i: (0, 0)),           # b2: resident
            ],
            out_specs=pl.BlockSpec((TM, OUT_PAD), lambda i: (i, 0)),
        ),
        compiler_params=pltpu.CompilerParams(
            dimension_semantics=("parallel",),
        ),
        cost_estimate=cost,
    )(x, w1p, b1p, w2p, b2p)

    # strip the lane padding of the class dimension
    return out[:, :NUM_CLASSES]


def an_forward(x_nchw, w1, b1, w2, b2, *, tm=DEFAULT_TM):
    """Convenience wrapper (prepares params per call)."""
    return an_forward_prepared(x_nchw, *prepare_params(w1, b1, w2, b2), tm=tm)


def init_params(key):
    """Deterministic init, mirrors nn.Linear shapes.
    Weights stored as (in, out) == W.T of PyTorch's (out, in)."""
    k1, k2, k3, k4 = jax.random.split(key, 4)
    bound1 = 1.0 / (IN_FEATURES ** 0.5)
    bound2 = 1.0 / (HIDDEN ** 0.5)
    w1 = jax.random.uniform(k1, (IN_FEATURES, HIDDEN), jnp.float32,
                            minval=-bound1, maxval=bound1)
    b1 = jax.random.uniform(k2, (1, HIDDEN), jnp.float32,
                            minval=-bound1, maxval=bound1)
    w2 = jax.random.uniform(k3, (HIDDEN, NUM_CLASSES), jnp.float32,
                            minval=-bound2, maxval=bound2)
    b2 = jax.random.uniform(k4, (1, NUM_CLASSES), jnp.float32,
                            minval=-bound2, maxval=bound2)
    return w1, b1, w2, b2


if __name__ == "__main__":
    key = jax.random.PRNGKey(0)
    kx, kp = jax.random.split(key)
    B = 2
    x = jax.random.normal(kx, (B, 1, 28, 28), jnp.float32)  # NCHW
    w1, b1, w2, b2 = init_params(kp)

    # one-time param prep (hoisted), then the kernel call
    params = prepare_params(w1, b1, w2, b2)
    out = an_forward_prepared(x, *params)
    jax.block_until_ready(out)
    assert out.shape == (B, NUM_CLASSES)

    # matched-precision reference (bf16 inputs/weights, f32 accumulation)
    xf = x.reshape(B, -1)
    h_ref = jnp.dot(xf.astype(jnp.bfloat16), w1.astype(jnp.bfloat16),
                    preferred_element_type=jnp.float32) + b1
    ref = jnp.dot(h_ref.astype(jnp.bfloat16), w2.astype(jnp.bfloat16),
                  preferred_element_type=jnp.float32) + b2
    assert jnp.allclose(out, ref, atol=1e-2, rtol=1e-2)

    # sanity vs full-f32 math (loose: bf16 quantization of x/w)
    ref_f32 = (xf @ w1 + b1) @ w2 + b2
    assert jnp.allclose(out, ref_f32, atol=1e-1, rtol=1e-1)

    print("KERNEL_OK")
</pallas_src>

<mosaic_0001>
module attributes {stable_mosaic.version = 11 : i64} {
  func.func @mlp_kernel(%arg0: i32, %arg1: memref<8x784xf32, #tpu.memory_space<vmem>>, %arg2: memref<784x128xbf16, #tpu.memory_space<vmem>>, %arg3: memref<1x128xf32, #tpu.memory_space<vmem>>, %arg4: memref<128x128xbf16, #tpu.memory_space<vmem>>, %arg5: memref<1x128xf32, #tpu.memory_space<vmem>>, %arg6: memref<8x128xf32, #tpu.memory_space<vmem>>) attributes {dimension_semantics = [#tpu.dimension_semantics<parallel>], iteration_bounds = array<i64: 1>, scalar_prefetch = 0 : i64, scratch_operands = 0 : i64, tpu.core_type = #tpu.core_type<tc>, window_params = [{transform_indices = @transform_0, window_bounds = array<i64: 8, 784>}, {pipeline_mode = #tpu.pipeline_mode<synchronous>, transform_indices = @transform_1, window_bounds = array<i64: 784, 128>}, {pipeline_mode = #tpu.pipeline_mode<synchronous>, transform_indices = @transform_2, window_bounds = array<i64: 1, 128>}, {pipeline_mode = #tpu.pipeline_mode<synchronous>, transform_indices = @transform_3, window_bounds = array<i64: 128, 128>}, {pipeline_mode = #tpu.pipeline_mode<synchronous>, transform_indices = @transform_4, window_bounds = array<i64: 1, 128>}, {transform_indices = @transform_5, window_bounds = array<i64: 8, 128>}]} {
    %c0 = arith.constant 0 : index
    %c0_0 = arith.constant 0 : index
    %0 = vector.load %arg1[%c0, %c0_0] : memref<8x784xf32, #tpu.memory_space<vmem>>, vector<8x784xf32>
    %1 = arith.truncf %0 : vector<8x784xf32> to vector<8x784xbf16>
    %c0_1 = arith.constant 0 : index
    %c0_2 = arith.constant 0 : index
    %2 = vector.load %arg2[%c0_1, %c0_2] : memref<784x128xbf16, #tpu.memory_space<vmem>>, vector<784x128xbf16>
    %cst = arith.constant dense<0.000000e+00> : vector<8x128xf32>
    %3 = tpu.matmul %1, %2, %cst {dimension_numbers = #tpu.dot_dimension_numbers<[1], [0], [0], [1], [0, 0, 1, 1], [], []>} : vector<8x784xbf16>, vector<784x128xbf16>, vector<8x128xf32> -> vector<8x128xf32>
    %c0_3 = arith.constant 0 : index
    %c0_4 = arith.constant 0 : index
    %4 = vector.load %arg3[%c0_3, %c0_4] : memref<1x128xf32, #tpu.memory_space<vmem>>, vector<1x128xf32>
    %5 = vector.broadcast %4 : vector<1x128xf32> to vector<8x128xf32>
    %6 = arith.addf %3, %5 : vector<8x128xf32>
    %7 = arith.truncf %6 : vector<8x128xf32> to vector<8x128xbf16>
    %c0_5 = arith.constant 0 : index
    %c0_6 = arith.constant 0 : index
    %8 = vector.load %arg4[%c0_5, %c0_6] : memref<128x128xbf16, #tpu.memory_space<vmem>>, vector<128x128xbf16>
    %cst_7 = arith.constant dense<0.000000e+00> : vector<8x128xf32>
    %9 = tpu.matmul %7, %8, %cst_7 {dimension_numbers = #tpu.dot_dimension_numbers<[1], [0], [0], [1], [0, 0, 1, 1], [], []>} : vector<8x128xbf16>, vector<128x128xbf16>, vector<8x128xf32> -> vector<8x128xf32>
    %c0_8 = arith.constant 0 : index
    %c0_9 = arith.constant 0 : index
    %10 = vector.load %arg5[%c0_8, %c0_9] : memref<1x128xf32, #tpu.memory_space<vmem>>, vector<1x128xf32>
    %11 = vector.broadcast %10 : vector<1x128xf32> to vector<8x128xf32>
    %12 = arith.addf %9, %11 : vector<8x128xf32>
    %c0_10 = arith.constant 0 : index
    %c0_11 = arith.constant 0 : index
    %13 = vector.load %arg6[%c0_10, %c0_11] : memref<8x128xf32, #tpu.memory_space<vmem>>, vector<8x128xf32>
    tpu.vector_store %arg6[%c0_10, %c0_11], %12 {strides = array<i32>} : memref<8x128xf32, #tpu.memory_space<vmem>>, vector<8x128xf32>,
    return
  }
  func.func @transform_0(%arg0: i32) -> (i32, i32) {
    %c0_i32 = arith.constant 0 : i32
    %c0_i32_0 = arith.constant 0 : i32
    return %arg0, %c0_i32 : i32, i32
  }
  func.func @transform_1(%arg0: i32) -> (i32, i32) {
    %c0_i32 = arith.constant 0 : i32
    %c0_i32_0 = arith.constant 0 : i32
    %c0_i32_1 = arith.constant 0 : i32
    return %c0_i32, %c0_i32_0 : i32, i32
  }
  func.func @transform_2(%arg0: i32) -> (i32, i32) {
    %c0_i32 = arith.constant 0 : i32
    %c0_i32_0 = arith.constant 0 : i32
    %c0_i32_1 = arith.constant 0 : i32
    return %c0_i32, %c0_i32_0 : i32, i32
  }
  func.func @transform_3(%arg0: i32) -> (i32, i32) {
    %c0_i32 = arith.constant 0 : i32
    %c0_i32_0 = arith.constant 0 : i32
    %c0_i32_1 = arith.constant 0 : i32
    return %c0_i32, %c0_i32_0 : i32, i32
  }
  func.func @transform_4(%arg0: i32) -> (i32, i32) {
    %c0_i32 = arith.constant 0 : i32
    %c0_i32_0 = arith.constant 0 : i32
    %c0_i32_1 = arith.constant 0 : i32
    return %c0_i32, %c0_i32_0 : i32, i32
  }
  func.func @transform_5(%arg0: i32) -> (i32, i32) {
    %c0_i32 = arith.constant 0 : i32
    %c0_i32_0 = arith.constant 0 : i32
    return %arg0, %c0_i32 : i32, i32
  }
}

</mosaic_0001>

<llo_original>
// kernel: tpu_custom_call.1
$region0: #{tpu_custom_call.1}
  #allocation0 [shape = 'u32[]', space=smem, size = 0x4, offset = 0x4, fixed_abs, tag = 'smem constant byte address 0x4 - core index']
  #allocation1 [shape = 'u32[144,128]{1,0:T(1,128)}', space=vmem, size = 0x12000, scoped, tag = 'internal scratch']
  %s0 = inlined_call_operand.hbm [shape: f32[2,784], index: 0, kind: input, shape index: {}]
  %s1 = inlined_call_operand.hbm [shape: bf16[784,128], index: 1, kind: input, shape index: {}]
  %s2 = inlined_call_operand.vmem [shape: f32[1,128], index: 2, kind: input, shape index: {}]
  %s3 = inlined_call_operand.hbm [shape: bf16[128,128], index: 3, kind: input, shape index: {}]
  %s4 = inlined_call_operand.vmem [shape: f32[1,128], index: 4, kind: input, shape index: {}]
  %s5 = inlined_call_operand.hbm [shape: f32[2,128], index: 5, kind: output, shape index: {}]
  %s6 = sld [smem:[#allocation0]]
  $region42: #{tpu_custom_call.1} parent=0
    _
  %s8 = ssub.s32 1, %s6
  %s9 = scalar_select 0, %s8, %s6
  $region1: #{tpu_custom_call.1} parent=0
    #allocation2 [shape = 'u8[28672]{0}', space=vmem, size = 0x7000, scoped, tag = 'input window, operand 0, single buffered']
    #allocation3 [shape = 's32[1]{0}', space=sflag, size = 0x4, scoped, tag = 'scoped memory for tpu_custom_call.1']
    #allocation4 [shape = 's32[1]{0}', space=sflag, size = 0x4, scoped, tag = 'scoped memory for tpu_custom_call.1']
    #allocation5 [shape = 'u8[200704]{0}', space=vmem, size = 0x31000, scoped, tag = 'input window, operand 1, single buffered']
    #allocation6 [shape = 's32[1]{0}', space=sflag, size = 0x4, scoped, tag = 'scoped memory for tpu_custom_call.1']
    #allocation7 [shape = 'u8[32768]{0}', space=vmem, size = 0x8000, scoped, tag = 'input window, operand 3, single buffered']
    #allocation8 [shape = 'u8[4096]{0}', space=vmem, size = 0x1000, scoped, tag = 'output window, operand 0, single buffered']
    %10 = vsyncpa [#allocation3], 0
    %11 = vsyncpa [#allocation6], 0
    %12 = vsyncpa [#allocation4], 0
    // Predicated region
    $region2: #{tpu_custom_call.1} parent=1 // pred_check
      _
    $region3: #{tpu_custom_call.1} parent=1 // pred_check_branch
      %14 = sbr.rel (0) target = $region5
    $region4: #{tpu_custom_call.1} parent=1 // pred_region
      %s16 = ssub.s32 896, 224
      %17 = vsyncadd [#allocation3], %s16
      %s18 = sshll.u32 [#allocation2], 4
      %s19 = int_to_ptr.vmem [resolvable:$true] %s18
      %24 = dma.hbm_to_vmem [thread:$0]  %s0, 224, %s19, [#allocation3], 224, 224, 14
    $region5: #{tpu_custom_call.1} parent=1 // pred_fallthru
      _
    // Predicated region
    $region6: #{tpu_custom_call.1} parent=1 // pred_check
      _
    $region7: #{tpu_custom_call.1} parent=1 // pred_check_branch
      %26 = sbr.rel (0) target = $region9
    $region8: #{tpu_custom_call.1} parent=1 // pred_region
      %s28 = ssub.s32 6272, 6272
      %29 = vsyncadd [#allocation6], %s28
      %s30 = sshll.u32 [#allocation5], 4
      %s31 = int_to_ptr.vmem [resolvable:$true] %s30
      %36 = dma.hbm_to_vmem [thread:$0]  %s1, 6272, %s31, [#allocation6], 64, 64, 4
    $region9: #{tpu_custom_call.1} parent=1 // pred_fallthru
      _
    // Predicated region
    $region10: #{tpu_custom_call.1} parent=1 // pred_check
      _
    $region11: #{tpu_custom_call.1} parent=1 // pred_check_branch
      %38 = sbr.rel (0) target = $region13
    $region12: #{tpu_custom_call.1} parent=1 // pred_region
      _
    $region13: #{tpu_custom_call.1} parent=1 // pred_fallthru
      _
    // Predicated region
    $region14: #{tpu_custom_call.1} parent=1 // pred_check
      _
    $region15: #{tpu_custom_call.1} parent=1 // pred_check_branch
      %40 = sbr.rel (0) target = $region17
    $region16: #{tpu_custom_call.1} parent=1 // pred_region
      %s42 = ssub.s32 1024, 1024
      %43 = vsyncadd [#allocation6], %s42
      %s44 = sshll.u32 [#allocation7], 4
      %s45 = int_to_ptr.vmem [resolvable:$true] %s44
      %50 = dma.hbm_to_vmem [thread:$0]  %s3, 1024, %s45, [#allocation6], 64, 64, 4
    $region17: #{tpu_custom_call.1} parent=1 // pred_fallthru
      _
    // Predicated region
    $region18: #{tpu_custom_call.1} parent=1 // pred_check
      _
    $region19: #{tpu_custom_call.1} parent=1 // pred_check_branch
      %52 = sbr.rel (0) target = $region21
    $region20: #{tpu_custom_call.1} parent=1 // pred_region
      _
    $region21: #{tpu_custom_call.1} parent=1 // pred_fallthru
      _
    // Predicated region
    $region22: #{tpu_custom_call.1} parent=1 // pred_check
      _
    $region23: #{tpu_custom_call.1} parent=1 // pred_check_branch
      %54 = sbr.rel (0) target = $region25
    $region24: #{tpu_custom_call.1} parent=1 // pred_region
      %55 = dma.done [#allocation3], 896
    $region25: #{tpu_custom_call.1} parent=1 // pred_fallthru
      _
    // Predicated region
    $region26: #{tpu_custom_call.1} parent=1 // pred_check
      _
    $region27: #{tpu_custom_call.1} parent=1 // pred_check_branch
      %57 = sbr.rel (0) target = $region29
    $region28: #{tpu_custom_call.1} parent=1 // pred_region
      %58 = dma.done [#allocation6], 6272
    $region29: #{tpu_custom_call.1} parent=1 // pred_fallthru
      _
    // Predicated region
    $region30: #{tpu_custom_call.1} parent=1 // pred_check
      _
    $region31: #{tpu_custom_call.1} parent=1 // pred_check_branch
      %60 = sbr.rel (0) target = $region33
    $region32: #{tpu_custom_call.1} parent=1 // pred_region
      %61 = dma.done [#allocation6], 1024
    $region33: #{tpu_custom_call.1} parent=1 // pred_fallthru
      _
    %v63 = vld [vmem:[#allocation2] sm:$0xff]
    %v64 = vld [vmem:[#allocation2 + $0x8] sm:$0x3f]
    %v65 = vld [vmem:[#allocation2 + $0xe] sm:$0xff]
    %v66 = vld [vmem:[#allocation2 + $0x16] sm:$0x3f]
    %v67 = vld [vmem:[#allocation2 + $0x1c] sm:$0xff]
    %v68 = vld [vmem:[#allocation2 + $0x24] sm:$0x3f]
    %v69 = vld [vmem:[#allocation2 + $0x2a] sm:$0xff]
    %v70 = vld [vmem:[#allocation2 + $0x32] sm:$0x3f]
    %v79 = vcombine.low %v63, %v65
    %v80 = vcombine.high %v63, %v65
    %v81 = vcombine.low %v67, %v69
    %v82 = vcombine.high %v67, %v69
    %v84 = vunpack.c.l.s4 1983009808
    %v85 = vunpack.c.0.s8 %v84
    %v86 = vlaneseq
    %v87 = vshrl.u32 %v86, 7
    %v88 = vsub.s32 %v85, %v87
    %v89 = vrot.slane %v79, %v88
    %v91 = vunpack.c.l.s4 1983009808
    %v92 = vunpack.c.0.s8 %v91
    %v93 = vlaneseq
    %v94 = vshrl.u32 %v93, 7
    %v95 = vsub.s32 %v92, %v94
    %v96 = vrot.slane %v80, %v95
    %v98 = vunpack.c.l.s4 1983009808
    %v99 = vunpack.c.0.s8 %v98
    %v100 = vlaneseq
    %v101 = vshrl.u32 %v100, 7
    %v102 = vsub.s32 %v99, %v101
    %v103 = vrot.slane %v81, %v102
    %v105 = vunpack.c.l.s4 1983009808
    %v106 = vunpack.c.0.s8 %v105
    %v107 = vlaneseq
    %v108 = vshrl.u32 %v107, 7
    %v109 = vsub.s32 %v106, %v108
    %v110 = vrot.slane %v82, %v109
    %v111 = vcombine.low %v89, %v103
    %v112 = vcombine.high %v89, %v103
    %v113 = vcombine.low %v96, %v110
    %v114 = vcombine.high %v96, %v110
    %v115 = vcombine.low %v64, %v66
    %v116 = vcombine.high %v64, %v66
    %v117 = vcombine.low %v68, %v70
    %v118 = vcombine.high %v68, %v70
    %v120 = vunpack.c.l.s4 1983009808
    %v121 = vunpack.c.0.s8 %v120
    %v122 = vlaneseq
    %v123 = vshrl.u32 %v122, 7
    %v124 = vsub.s32 %v121, %v123
    %v125 = vrot.slane %v115, %v124
    %v127 = vunpack.c.l.s4 1983009808
    %v128 = vunpack.c.0.s8 %v127
    %v129 = vlaneseq
    %v130 = vshrl.u32 %v129, 7
    %v131 = vsub.s32 %v128, %v130
    %v132 = vrot.slane %v116, %v131
    %v134 = vunpack.c.l.s4 1983009808
    %v135 = vunpack.c.0.s8 %v134
    %v136 = vlaneseq
    %v137 = vshrl.u32 %v136, 7
    %v138 = vsub.s32 %v135, %v137
    %v139 = vrot.slane %v117, %v138
    %v141 = vunpack.c.l.s4 1983009808
    %v142 = vunpack.c.0.s8 %v141
    %v143 = vlaneseq
    %v144 = vshrl.u32 %v143, 7
    %v145 = vsub.s32 %v142, %v144
    %v146 = vrot.slane %v118, %v145
    %v147 = vcombine.low %v125, %v139
    %v148 = vcombine.high %v125, %v139
    %v149 = vcombine.low %v132, %v146
    %v157 = vpack.c.bf16 %v111, %v111
    %v158 = vpack.c.bf16 %v112, %v112
    %v159 = vpack.c.bf16 %v113, %v113
    %v160 = vpack.c.bf16 %v114, %v114
    %v161 = vpack.c.bf16 %v147, %v147
    %v162 = vpack.c.bf16 %v148, %v148
    %v163 = vpack.c.bf16 %v149, %v149
    %v164 = vld [vmem:[#allocation5] sm:$0xf]
    %v165 = vld [vmem:[#allocation5 + $0x4] sm:$0xf]
    %v166 = vld [vmem:[#allocation5 + $0x8] sm:$0xf]
    %v167 = vld [vmem:[#allocation5 + $0xc] sm:$0xf]
    %v168 = vld [vmem:[#allocation5 + $0x10] sm:$0xf]
    %v169 = vld [vmem:[#allocation5 + $0x14] sm:$0xf]
    %v170 = vld [vmem:[#allocation5 + $0x18] sm:$0xf]
    %v171 = vld [vmem:[#allocation5 + $0x1c] sm:$0xf]
    %v172 = vld [vmem:[#allocation5 + $0x20] sm:$0xf]
    %v173 = vld [vmem:[#allocation5 + $0x24] sm:$0xf]
    %v174 = vld [vmem:[#allocation5 + $0x28] sm:$0xf]
    %v175 = vld [vmem:[#allocation5 + $0x2c] sm:$0xf]
    %v176 = vld [vmem:[#allocation5 + $0x30] sm:$0xf]
    %v177 = vld [vmem:[#allocation5 + $0x34] sm:$0xf]
    %v178 = vld [vmem:[#allocation5 + $0x38] sm:$0xf]
    %v179 = vld [vmem:[#allocation5 + $0x3c] sm:$0xf]
    %v180 = vld [vmem:[#allocation5 + $0x40] sm:$0xf]
    %v181 = vld [vmem:[#allocation5 + $0x44] sm:$0xf]
    %v182 = vld [vmem:[#allocation5 + $0x48] sm:$0xf]
    %v183 = vld [vmem:[#allocation5 + $0x4c] sm:$0xf]
    %v184 = vld [vmem:[#allocation5 + $0x50] sm:$0xf]
    %v185 = vld [vmem:[#allocation5 + $0x54] sm:$0xf]
    %v186 = vld [vmem:[#allocation5 + $0x58] sm:$0xf]
    %v187 = vld [vmem:[#allocation5 + $0x5c] sm:$0xf]
    %v188 = vld [vmem:[#allocation5 + $0x60] sm:$0xf]
    %v189 = vld [vmem:[#allocation5 + $0x64] sm:$0xf]
    %v190 = vld [vmem:[#allocation5 + $0x68] sm:$0xf]
    %v191 = vld [vmem:[#allocation5 + $0x6c] sm:$0xf]
    %v192 = vld [vmem:[#allocation5 + $0x70] sm:$0xf]
    %v193 = vld [vmem:[#allocation5 + $0x74] sm:$0xf]
    %v194 = vld [vmem:[#allocation5 + $0x78] sm:$0xf]
    %v195 = vld [vmem:[#allocation5 + $0x7c] sm:$0xf]
    %v196 = vld [vmem:[#allocation5 + $0x80] sm:$0xf]
    %v197 = vld [vmem:[#allocation5 + $0x84] sm:$0xf]
    %v198 = vld [vmem:[#allocation5 + $0x88] sm:$0xf]
    %v199 = vld [vmem:[#allocation5 + $0x8c] sm:$0xf]
    %v200 = vld [vmem:[#allocation5 + $0x90] sm:$0xf]
    %v201 = vld [vmem:[#allocation5 + $0x94] sm:$0xf]
    %v202 = vld [vmem:[#allocation5 + $0x98] sm:$0xf]
    %v203 = vld [vmem:[#allocation5 + $0x9c] sm:$0xf]
    %v204 = vld [vmem:[#allocation5 + $0xa0] sm:$0xf]
    %v205 = vld [vmem:[#allocation5 + $0xa4] sm:$0xf]
    %v206 = vld [vmem:[#allocation5 + $0xa8] sm:$0xf]
    %v207 = vld [vmem:[#allocation5 + $0xac] sm:$0xf]
    %v208 = vld [vmem:[#allocation5 + $0xb0] sm:$0xf]
    %v209 = vld [vmem:[#allocation5 + $0xb4] sm:$0xf]
    %v210 = vld [vmem:[#allocation5 + $0xb8] sm:$0xf]
    %v211 = vld [vmem:[#allocation5 + $0xbc] sm:$0xf]
    %v212 = vld [vmem:[#allocation5 + $0xc0] sm:$0xf]
    %v213 = vld [vmem:[#allocation5 + $0xc4] sm:$0xf]
    %v214 = vld [vmem:[#allocation5 + $0xc8] sm:$0xf]
    %v215 = vld [vmem:[#allocation5 + $0xcc] sm:$0xf]
    %v216 = vld [vmem:[#allocation5 + $0xd0] sm:$0xf]
    %v217 = vld [vmem:[#allocation5 + $0xd4] sm:$0xf]
    %v218 = vld [vmem:[#allocation5 + $0xd8] sm:$0xf]
    %v219 = vld [vmem:[#allocation5 + $0xdc] sm:$0xf]
    %v220 = vld [vmem:[#allocation5 + $0xe0] sm:$0xf]
    %v221 = vld [vmem:[#allocation5 + $0xe4] sm:$0xf]
    %v222 = vld [vmem:[#allocation5 + $0xe8] sm:$0xf]
    %v223 = vld [vmem:[#allocation5 + $0xec] sm:$0xf]
    %v224 = vld [vmem:[#allocation5 + $0xf0] sm:$0xf]
    %v225 = vld [vmem:[#allocation5 + $0xf4] sm:$0xf]
    %v226 = vld [vmem:[#allocation5 + $0xf8] sm:$0xf]
    %v227 = vld [vmem:[#allocation5 + $0xfc] sm:$0xf]
    %v228 = vld [vmem:[#allocation5 + $0x100] sm:$0xf]
    %v229 = vld [vmem:[#allocation5 + $0x104] sm:$0xf]
    %v230 = vld [vmem:[#allocation5 + $0x108] sm:$0xf]
    %v231 = vld [vmem:[#allocation5 + $0x10c] sm:$0xf]
    %v232 = vld [vmem:[#allocation5 + $0x110] sm:$0xf]
    %v233 = vld [vmem:[#allocation5 + $0x114] sm:$0xf]
    %v234 = vld [vmem:[#allocation5 + $0x118] sm:$0xf]
    %v235 = vld [vmem:[#allocation5 + $0x11c] sm:$0xf]
    %v236 = vld [vmem:[#allocation5 + $0x120] sm:$0xf]
    %v237 = vld [vmem:[#allocation5 + $0x124] sm:$0xf]
    %v238 = vld [vmem:[#allocation5 + $0x128] sm:$0xf]
    %v239 = vld [vmem:[#allocation5 + $0x12c] sm:$0xf]
    %v240 = vld [vmem:[#allocation5 + $0x130] sm:$0xf]
    %v241 = vld [vmem:[#allocation5 + $0x134] sm:$0xf]
    %v242 = vld [vmem:[#allocation5 + $0x138] sm:$0xf]
    %v243 = vld [vmem:[#allocation5 + $0x13c] sm:$0xf]
    %v244 = vld [vmem:[#allocation5 + $0x140] sm:$0xf]
    %v245 = vld [vmem:[#allocation5 + $0x144] sm:$0xf]
    %v246 = vld [vmem:[#allocation5 + $0x148] sm:$0xf]
    %v247 = vld [vmem:[#allocation5 + $0x14c] sm:$0xf]
    %v248 = vld [vmem:[#allocation5 + $0x150] sm:$0xf]
    %v249 = vld [vmem:[#allocation5 + $0x154] sm:$0xf]
    %v250 = vld [vmem:[#allocation5 + $0x158] sm:$0xf]
    %v251 = vld [vmem:[#allocation5 + $0x15c] sm:$0xf]
    %v252 = vld [vmem:[#allocation5 + $0x160] sm:$0xf]
    %v253 = vld [vmem:[#allocation5 + $0x164] sm:$0xf]
    %v254 = vld [vmem:[#allocation5 + $0x168] sm:$0xf]
    %v255 = vld [vmem:[#allocation5 + $0x16c] sm:$0xf]
    %v256 = vld [vmem:[#allocation5 + $0x170] sm:$0xf]
    %v257 = vld [vmem:[#allocation5 + $0x174] sm:$0xf]
    %v258 = vld [vmem:[#allocation5 + $0x178] sm:$0xf]
    %v259 = vld [vmem:[#allocation5 + $0x17c] sm:$0xf]
    %v260 = vld [vmem:[#allocation5 + $0x180] sm:$0xf]
    %v261 = vld [vmem:[#allocation5 + $0x184] sm:$0xf]
    %v262 = vld [vmem:[%s2] sm:$0x1]
    %v264 = vlaneseq
    %v265 = vshrl.u32 %v264, 7
    %v266 = vsub.s32 0, %v265
    %v267 = vrot.slane %v262, %v266
    %v367 = vunpack.c.l.b16 %v164
    %v368 = vunpack.c.l.b16 %v165
    %v369 = vunpack.c.l.b16 %v166
    %v370 = vunpack.c.l.b16 %v167
    %v371 = vunpack.c.l.b16 %v168
    %v372 = vunpack.c.l.b16 %v169
    %v373 = vunpack.c.l.b16 %v170
    %v374 = vunpack.c.l.b16 %v171
    %v375 = vunpack.c.l.b16 %v172
    %v376 = vunpack.c.l.b16 %v173
    %v377 = vunpack.c.l.b16 %v174
    %v378 = vunpack.c.l.b16 %v175
    %v379 = vunpack.c.l.b16 %v176
    %v380 = vunpack.c.l.b16 %v177
    %v381 = vunpack.c.l.b16 %v178
    %v382 = vunpack.c.l.b16 %v179
    %v383 = vunpack.c.l.b16 %v180
    %v384 = vunpack.c.l.b16 %v181
    %v385 = vunpack.c.l.b16 %v182
    %v386 = vunpack.c.l.b16 %v183
    %v387 = vunpack.c.l.b16 %v184
    %v388 = vunpack.c.l.b16 %v185
    %v389 = vunpack.c.l.b16 %v186
    %v390 = vunpack.c.l.b16 %v187
    %v391 = vunpack.c.l.b16 %v188
    %v392 = vunpack.c.l.b16 %v189
    %v393 = vunpack.c.l.b16 %v190
    %v394 = vunpack.c.l.b16 %v191
    %v395 = vunpack.c.l.b16 %v192
    %v396 = vunpack.c.l.b16 %v193
    %v397 = vunpack.c.l.b16 %v194
    %v398 = vunpack.c.l.b16 %v195
    %v399 = vunpack.c.l.b16 %v196
    %v400 = vunpack.c.l.b16 %v197
    %v401 = vunpack.c.l.b16 %v198
    %v402 = vunpack.c.l.b16 %v199
    %v403 = vunpack.c.l.b16 %v200
    %v404 = vunpack.c.l.b16 %v201
    %v405 = vunpack.c.l.b16 %v202
    %v406 = vunpack.c.l.b16 %v203
    %v407 = vunpack.c.l.b16 %v204
    %v408 = vunpack.c.l.b16 %v205
    %v409 = vunpack.c.l.b16 %v206
    %v410 = vunpack.c.l.b16 %v207
    %v411 = vunpack.c.l.b16 %v208
    %v412 = vunpack.c.l.b16 %v209
    %v413 = vunpack.c.l.b16 %v210
    %v414 = vunpack.c.l.b16 %v211
    %v415 = vunpack.c.l.b16 %v212
    %v416 = vunpack.c.l.b16 %v213
    %v417 = vunpack.c.l.b16 %v214
    %v418 = vunpack.c.l.b16 %v215
    %v419 = vunpack.c.l.b16 %v216
    %v420 = vunpack.c.l.b16 %v217
    %v421 = vunpack.c.l.b16 %v218
    %v422 = vunpack.c.l.b16 %v219
    %v423 = vunpack.c.l.b16 %v220
    %v424 = vunpack.c.l.b16 %v221
    %v425 = vunpack.c.l.b16 %v222
    %v426 = vunpack.c.l.b16 %v223
    %v427 = vunpack.c.l.b16 %v224
    %v428 = vunpack.c.l.b16 %v225
    %v429 = vunpack.c.l.b16 %v226
    %v430 = vunpack.c.l.b16 %v227
    %v431 = vunpack.c.l.b16 %v228
    %v432 = vunpack.c.l.b16 %v229
    %v433 = vunpack.c.l.b16 %v230
    %v434 = vunpack.c.l.b16 %v231
    %v435 = vunpack.c.l.b16 %v232
    %v436 = vunpack.c.l.b16 %v233
    %v437 = vunpack.c.l.b16 %v234
    %v438 = vunpack.c.l.b16 %v235
    %v439 = vunpack.c.l.b16 %v236
    %v440 = vunpack.c.l.b16 %v237
    %v441 = vunpack.c.l.b16 %v238
    %v442 = vunpack.c.l.b16 %v239
    %v443 = vunpack.c.l.b16 %v240
    %v444 = vunpack.c.l.b16 %v241
    %v445 = vunpack.c.l.b16 %v242
    %v446 = vunpack.c.l.b16 %v243
    %v447 = vunpack.c.l.b16 %v244
    %v448 = vunpack.c.l.b16 %v245
    %v449 = vunpack.c.l.b16 %v246
    %v450 = vunpack.c.l.b16 %v247
    %v451 = vunpack.c.l.b16 %v248
    %v452 = vunpack.c.l.b16 %v249
    %v453 = vunpack.c.l.b16 %v250
    %v454 = vunpack.c.l.b16 %v251
    %v455 = vunpack.c.l.b16 %v252
    %v456 = vunpack.c.l.b16 %v253
    %v457 = vunpack.c.l.b16 %v254
    %v458 = vunpack.c.l.b16 %v255
    %v459 = vunpack.c.l.b16 %v256
    %v460 = vunpack.c.l.b16 %v257
    %v461 = vunpack.c.l.b16 %v258
    %v462 = vunpack.c.l.b16 %v259
    %v463 = vunpack.c.l.b16 %v260
    %v464 = vunpack.c.l.b16 %v261
    %v465 = vpack.c.b16 %v368, %v367
    %v466 = vpack.c.b16 %v370, %v369
    %v467 = vpack.c.b16 %v372, %v371
    %v468 = vpack.c.b16 %v374, %v373
    %v469 = vpack.c.b16 %v376, %v375
    %v470 = vpack.c.b16 %v378, %v377
    %v471 = vpack.c.b16 %v380, %v379
    %v472 = vpack.c.b16 %v382, %v381
    %v473 = vpack.c.b16 %v384, %v383
    %v474 = vpack.c.b16 %v386, %v385
    %v475 = vpack.c.b16 %v388, %v387
    %v476 = vpack.c.b16 %v390, %v389
    %v477 = vpack.c.b16 %v392, %v391
    %v478 = vpack.c.b16 %v394, %v393
    %v479 = vpack.c.b16 %v396, %v395
    %v480 = vpack.c.b16 %v398, %v397
    %v481 = vpack.c.b16 %v400, %v399
    %v482 = vpack.c.b16 %v402, %v401
    %v483 = vpack.c.b16 %v404, %v403
    %v484 = vpack.c.b16 %v406, %v405
    %v485 = vpack.c.b16 %v408, %v407
    %v486 = vpack.c.b16 %v410, %v409
    %v487 = vpack.c.b16 %v412, %v411
    %v488 = vpack.c.b16 %v414, %v413
    %v489 = vpack.c.b16 %v416, %v415
    %v490 = vpack.c.b16 %v418, %v417
    %v491 = vpack.c.b16 %v420, %v419
    %v492 = vpack.c.b16 %v422, %v421
    %v493 = vpack.c.b16 %v424, %v423
    %v494 = vpack.c.b16 %v426, %v425
    %v495 = vpack.c.b16 %v428, %v427
    %v496 = vpack.c.b16 %v430, %v429
    %v497 = vpack.c.b16 %v432, %v431
    %v498 = vpack.c.b16 %v434, %v433
    %v499 = vpack.c.b16 %v436, %v435
    %v500 = vpack.c.b16 %v438, %v437
    %v501 = vpack.c.b16 %v440, %v439
    %v502 = vpack.c.b16 %v442, %v441
    %v503 = vpack.c.b16 %v444, %v443
    %v504 = vpack.c.b16 %v446, %v445
    %v505 = vpack.c.b16 %v448, %v447
    %v506 = vpack.c.b16 %v450, %v449
    %v507 = vpack.c.b16 %v452, %v451
    %v508 = vpack.c.b16 %v454, %v453
    %v509 = vpack.c.b16 %v456, %v455
    %v510 = vpack.c.b16 %v458, %v457
    %v511 = vpack.c.b16 %v460, %v459
    %v512 = vpack.c.b16 %v462, %v461
    %v513 = vpack.c.b16 %v464, %v463
    %vm563 = vcmask 130048
    %v565 = vsel %vm563, %v163, 0
    %567 = vmatprep.subr.bf16.mxu0 0
    %568 = vmatpush1.bf16.msra.mxu0 %v472
    %569 = vmatprep.subr.bf16.mxu0 0
    %570 = vmatpush1.bf16.msra.mxu0 %v471
    %571 = vmatprep.subr.bf16.mxu0 0
    %572 = vmatpush1.bf16.msra.mxu0 %v470
    %573 = vmatprep.subr.bf16.mxu0 0
    %574 = vmatpush1.bf16.msra.mxu0 %v469
    %575 = vmatprep.subr.bf16.mxu0 0
    %576 = vmatpush1.bf16.msra.mxu0 %v468
    %577 = vmatprep.subr.bf16.mxu0 0
    %578 = vmatpush1.bf16.msra.mxu0 %v467
    %579 = vmatprep.subr.bf16.mxu0 0
    %580 = vmatpush1.bf16.msra.mxu0 %v466
    %581 = vmatprep.subr.bf16.mxu0 0
    %582 = vmatpush1.bf16.msra.mxu0 %v465
    %583 = vmatprep.subr.bf16.mxu0 0
    %584 = vmatpush2.bf16.msra.mxu0 %v480
    %585 = vmatprep.subr.bf16.mxu0 0
    %586 = vmatpush2.bf16.msra.mxu0 %v479
    %587 = vmatprep.subr.bf16.mxu0 0
    %588 = vmatpush2.bf16.msra.mxu0 %v478
    %589 = vmatprep.subr.bf16.mxu0 0
    %590 = vmatpush2.bf16.msra.mxu0 %v477
    %591 = vmatprep.subr.bf16.mxu0 0
    %592 = vmatpush2.bf16.msra.mxu0 %v476
    %593 = vmatprep.subr.bf16.mxu0 0
    %594 = vmatpush2.bf16.msra.mxu0 %v475
    %595 = vmatprep.subr.bf16.mxu0 0
    %596 = vmatpush2.bf16.msra.mxu0 %v474
    %597 = vmatprep.subr.bf16.mxu0 0
    %598 = vmatpush2.bf16.msra.mxu0 %v473
    %599 = vmatprep.mubr.bf16.mxu0 %v158
    %600 = vmatmul.mubr.bf16.gmra.mxu0 %v157
    %v601 = vpop.f32.mrf.mxu0
    %v602 = vadd.f32 %v267, %v601
    %v603 = vpop.f32.mrf.mxu0
    %v604 = vpop.f32.mrf.mxu0
    %v605 = vpop.f32.mrf.mxu0
    %606 = vdwg.mxu0
    %607 = vmatprep.subr.bf16.mxu0 0
    %608 = vmatpush1.bf16.msra.mxu0 %v488
    %609 = vmatprep.subr.bf16.mxu0 0
    %610 = vmatpush1.bf16.msra.mxu0 %v487
    %611 = vmatprep.subr.bf16.mxu0 0
    %612 = vmatpush1.bf16.msra.mxu0 %v486
    %613 = vmatprep.subr.bf16.mxu0 0
    %614 = vmatpush1.bf16.msra.mxu0 %v485
    %615 = vmatprep.subr.bf16.mxu0 0
    %616 = vmatpush1.bf16.msra.mxu0 %v484
    %617 = vmatprep.subr.bf16.mxu0 0
    %618 = vmatpush1.bf16.msra.mxu0 %v483
    %619 = vmatprep.subr.bf16.mxu0 0
    %620 = vmatpush1.bf16.msra.mxu0 %v482
    %621 = vmatprep.subr.bf16.mxu0 0
    %622 = vmatpush1.bf16.msra.mxu0 %v481
    %623 = vmatprep.subr.bf16.mxu0 0
    %624 = vmatpush2.bf16.msra.mxu0 %v496
    %625 = vmatprep.subr.bf16.mxu0 0
    %626 = vmatpush2.bf16.msra.mxu0 %v495
    %627 = vmatprep.subr.bf16.mxu0 0
    %628 = vmatpush2.bf16.msra.mxu0 %v494
    %629 = vmatprep.subr.bf16.mxu0 0
    %630 = vmatpush2.bf16.msra.mxu0 %v493
    %631 = vmatprep.subr.bf16.mxu0 0
    %632 = vmatpush2.bf16.msra.mxu0 %v492
    %633 = vmatprep.subr.bf16.mxu0 0
    %634 = vmatpush2.bf16.msra.mxu0 %v491
    %635 = vmatprep.subr.bf16.mxu0 0
    %636 = vmatpush2.bf16.msra.mxu0 %v490
    %637 = vmatprep.subr.bf16.mxu0 0
    %638 = vmatpush2.bf16.msra.mxu0 %v489
    %639 = vmatprep.mubr.bf16.mxu0 %v160
    %640 = vmatmul.mubr.bf16.gmra.mxu0 %v159
    %v641 = vpop.f32.mrf.mxu0
    %v642 = vadd.f32 %v602, %v641
    %v643 = vpop.f32.mrf.mxu0
    %v644 = vpop.f32.mrf.mxu0
    %v645 = vpop.f32.mrf.mxu0
    %646 = vdwg.mxu0
    %647 = vmatprep.subr.bf16.mxu0 0
    %648 = vmatpush1.bf16.msra.mxu0 %v504
    %649 = vmatprep.subr.bf16.mxu0 0
    %650 = vmatpush1.bf16.msra.mxu0 %v503
    %651 = vmatprep.subr.bf16.mxu0 0
    %652 = vmatpush1.bf16.msra.mxu0 %v502
    %653 = vmatprep.subr.bf16.mxu0 0
    %654 = vmatpush1.bf16.msra.mxu0 %v501
    %655 = vmatprep.subr.bf16.mxu0 0
    %656 = vmatpush1.bf16.msra.mxu0 %v500
    %657 = vmatprep.subr.bf16.mxu0 0
    %658 = vmatpush1.bf16.msra.mxu0 %v499
    %659 = vmatprep.subr.bf16.mxu0 0
    %660 = vmatpush1.bf16.msra.mxu0 %v498
    %661 = vmatprep.subr.bf16.mxu0 0
    %662 = vmatpush1.bf16.msra.mxu0 %v497
    %663 = vmatprep.subr.bf16.mxu0 0
    %664 = vmatpush2.bf16.msra.mxu0 %v512
    %665 = vmatprep.subr.bf16.mxu0 0
    %666 = vmatpush2.bf16.msra.mxu0 %v511
    %667 = vmatprep.subr.bf16.mxu0 0
    %668 = vmatpush2.bf16.msra.mxu0 %v510
    %669 = vmatprep.subr.bf16.mxu0 0
    %670 = vmatpush2.bf16.msra.mxu0 %v509
    %671 = vmatprep.subr.bf16.mxu0 0
    %672 = vmatpush2.bf16.msra.mxu0 %v508
    %673 = vmatprep.subr.bf16.mxu0 0
    %674 = vmatpush2.bf16.msra.mxu0 %v507
    %675 = vmatprep.subr.bf16.mxu0 0
    %676 = vmatpush2.bf16.msra.mxu0 %v506
    %677 = vmatprep.subr.bf16.mxu0 0
    %678 = vmatpush2.bf16.msra.mxu0 %v505
    %679 = vmatprep.mubr.bf16.mxu0 %v162
    %680 = vmatmul.mubr.bf16.gmra.mxu0 %v161
    %v681 = vpop.f32.mrf.mxu0
    %v682 = vadd.f32 %v642, %v681
    %v683 = vpop.f32.mrf.mxu0
    %v684 = vpop.f32.mrf.mxu0
    %v685 = vpop.f32.mrf.mxu0
    %686 = vdwg.mxu0
    %687 = vmatprep.subr.bf16.mxu0 0
    %688 = vmatpush1.bf16.msra.mxu0 0
    %689 = vmatprep.subr.bf16.mxu0 0
    %690 = vmatpush1.bf16.msra.mxu0 0
    %691 = vmatprep.subr.bf16.mxu0 0
    %692 = vmatpush1.bf16.msra.mxu0 0
    %693 = vmatprep.subr.bf16.mxu0 0
    %694 = vmatpush1.bf16.msra.mxu0 0
    %695 = vmatprep.subr.bf16.mxu0 0
    %696 = vmatpush1.bf16.msra.mxu0 0
    %697 = vmatprep.subr.bf16.mxu0 0
    %698 = vmatpush1.bf16.msra.mxu0 0
    %699 = vmatprep.subr.bf16.mxu0 0
    %700 = vmatpush1.bf16.msra.mxu0 0
    %701 = vmatprep.subr.bf16.mxu0 0
    %702 = vmatpush1.bf16.msra.mxu0 %v513
    %703 = vmatprep.subr.bf16.mxu0 0
    %704 = vmatpush2.bf16.msra.mxu0 0
    %705 = vmatprep.subr.bf16.mxu0 0
    %706 = vmatpush2.bf16.msra.mxu0 0
    %707 = vmatprep.subr.bf16.mxu0 0
    %708 = vmatpush2.bf16.msra.mxu0 0
    %709 = vmatprep.subr.bf16.mxu0 0
    %710 = vmatpush2.bf16.msra.mxu0 0
    %711 = vmatprep.subr.bf16.mxu0 0
    %712 = vmatpush2.bf16.msra.mxu0 0
    %713 = vmatprep.subr.bf16.mxu0 0
    %714 = vmatpush2.bf16.msra.mxu0 0
    %715 = vmatprep.subr.bf16.mxu0 0
    %716 = vmatpush2.bf16.msra.mxu0 0
    %717 = vmatprep.subr.bf16.mxu0 0
    %718 = vmatpush2.bf16.msra.mxu0 0
    %719 = vmatprep.mubr.bf16.mxu0 0
    %720 = vmatmul.mubr.bf16.gmra.mxu0 %v565
    %v721 = vpop.f32.mrf.mxu0
    %v722 = vadd.f32 %v682, %v721
    %v723 = vpop.f32.mrf.mxu0
    %v724 = vpop.f32.mrf.mxu0
    %v725 = vpop.f32.mrf.mxu0
    %726 = vdwg.mxu0
    %v727 = vpack.c.bf16 %v722, %v722
    %v728 = vld [vmem:[#allocation7] sm:$0xf]
    %v729 = vld [vmem:[#allocation7 + $0x4] sm:$0xf]
    %v730 = vld [vmem:[#allocation7 + $0x8] sm:$0xf]
    %v731 = vld [vmem:[#allocation7 + $0xc] sm:$0xf]
    %v732 = vld [vmem:[#allocation7 + $0x10] sm:$0xf]
    %v733 = vld [vmem:[#allocation7 + $0x14] sm:$0xf]
    %v734 = vld [vmem:[#allocation7 + $0x18] sm:$0xf]
    %v735 = vld [vmem:[#allocation7 + $0x1c] sm:$0xf]
    %v736 = vld [vmem:[#allocation7 + $0x20] sm:$0xf]
    %v737 = vld [vmem:[#allocation7 + $0x24] sm:$0xf]
    %v738 = vld [vmem:[#allocation7 + $0x28] sm:$0xf]
    %v739 = vld [vmem:[#allocation7 + $0x2c] sm:$0xf]
    %v740 = vld [vmem:[#allocation7 + $0x30] sm:$0xf]
    %v741 = vld [vmem:[#allocation7 + $0x34] sm:$0xf]
    %v742 = vld [vmem:[#allocation7 + $0x38] sm:$0xf]
    %v743 = vld [vmem:[#allocation7 + $0x3c] sm:$0xf]
    %v744 = vld [vmem:[%s4] sm:$0x1]
    %v746 = vlaneseq
    %v747 = vshrl.u32 %v746, 7
    %v748 = vsub.s32 0, %v747
    %v749 = vrot.slane %v744, %v748
    %v767 = vunpack.c.l.b16 %v728
    %v768 = vunpack.c.l.b16 %v729
    %v769 = vunpack.c.l.b16 %v730
    %v770 = vunpack.c.l.b16 %v731
    %v771 = vunpack.c.l.b16 %v732
    %v772 = vunpack.c.l.b16 %v733
    %v773 = vunpack.c.l.b16 %v734
    %v774 = vunpack.c.l.b16 %v735
    %v775 = vunpack.c.l.b16 %v736
    %v776 = vunpack.c.l.b16 %v737
    %v777 = vunpack.c.l.b16 %v738
    %v778 = vunpack.c.l.b16 %v739
    %v779 = vunpack.c.l.b16 %v740
    %v780 = vunpack.c.l.b16 %v741
    %v781 = vunpack.c.l.b16 %v742
    %v782 = vunpack.c.l.b16 %v743
    %v783 = vpack.c.b16 %v768, %v767
    %v784 = vpack.c.b16 %v770, %v769
    %v785 = vpack.c.b16 %v772, %v771
    %v786 = vpack.c.b16 %v774, %v773
    %v787 = vpack.c.b16 %v776, %v775
    %v788 = vpack.c.b16 %v778, %v777
    %v789 = vpack.c.b16 %v780, %v779
    %v790 = vpack.c.b16 %v782, %v781
    %799 = vmatprep.subr.bf16.mxu0 0
    %800 = vmatpush1.bf16.msra.mxu0 %v790
    %801 = vmatprep.subr.bf16.mxu0 0
    %802 = vmatpush1.bf16.msra.mxu0 %v789
    %803 = vmatprep.subr.bf16.mxu0 0
    %804 = vmatpush1.bf16.msra.mxu0 %v788
    %805 = vmatprep.subr.bf16.mxu0 0
    %806 = vmatpush1.bf16.msra.mxu0 %v787
    %807 = vmatprep.subr.bf16.mxu0 0
    %808 = vmatpush1.bf16.msra.mxu0 %v786
    %809 = vmatprep.subr.bf16.mxu0 0
    %810 = vmatpush1.bf16.msra.mxu0 %v785
    %811 = vmatprep.subr.bf16.mxu0 0
    %812 = vmatpush1.bf16.msra.mxu0 %v784
    %813 = vmatprep.subr.bf16.mxu0 0
    %814 = vmatpush1.bf16.msra.mxu0 %v783
    %815 = vmatprep.subr.bf16.mxu0 0
    %816 = vmatpush2.bf16.msra.mxu0 0
    %817 = vmatprep.subr.bf16.mxu0 0
    %818 = vmatpush2.bf16.msra.mxu0 0
    %819 = vmatprep.subr.bf16.mxu0 0
    %820 = vmatpush2.bf16.msra.mxu0 0
    %821 = vmatprep.subr.bf16.mxu0 0
    %822 = vmatpush2.bf16.msra.mxu0 0
    %823 = vmatprep.subr.bf16.mxu0 0
    %824 = vmatpush2.bf16.msra.mxu0 0
    %825 = vmatprep.subr.bf16.mxu0 0
    %826 = vmatpush2.bf16.msra.mxu0 0
    %827 = vmatprep.subr.bf16.mxu0 0
    %828 = vmatpush2.bf16.msra.mxu0 0
    %829 = vmatprep.subr.bf16.mxu0 0
    %830 = vmatpush2.bf16.msra.mxu0 0
    %831 = vmatprep.mubr.bf16.mxu0 0
    %832 = vmatmul.mubr.bf16.gmra.mxu0 %v727
    %v833 = vpop.f32.mrf.mxu0
    %v834 = vadd.f32 %v749, %v833
    %v835 = vpop.f32.mrf.mxu0
    %v836 = vpop.f32.mrf.mxu0
    %v837 = vpop.f32.mrf.mxu0
    %838 = vdwg.mxu0
    %839 = vst [vmem:[#allocation8] sm:$0xff] %v834
    // Predicated region
    $region34: #{tpu_custom_call.1} parent=1 // pred_check
      _
    $region35: #{tpu_custom_call.1} parent=1 // pred_check_branch
      %841 = sbr.rel (0) target = $region37
    $region36: #{tpu_custom_call.1} parent=1 // pred_region
      %s843 = ssub.s32 128, 32
      %844 = vsyncadd [#allocation4], %s843
      %s845 = sshll.u32 [#allocation8], 4
      %s846 = int_to_ptr.vmem [resolvable:$true] %s845
      %851 = dma.vmem_to_hbm [thread:$0]  %s846, 32, %s5, [#allocation4], 32, 32, 2
    $region37: #{tpu_custom_call.1} parent=1 // pred_fallthru
      _
    // Predicated region
    $region38: #{tpu_custom_call.1} parent=1 // pred_check
      _
    $region39: #{tpu_custom_call.1} parent=1 // pred_check_branch
      %853 = sbr.rel (0) target = $region41
    $region40: #{tpu_custom_call.1} parent=1 // pred_region
      %854 = dma.done [#allocation4], 128
    $region41: #{tpu_custom_call.1} parent=1 // pred_fallthru
      _
    %855 = vsyncpa [#allocation3], 1
    %856 = vsyncpa [#allocation6], 1
    %857 = vsyncpa [#allocation4], 1

</llo_original>
